<compile_context>
chip_gen: v6e
topology: v6e:2x2x1
jax: 0.10.0
libtpu: 0.0.40
codegen_flags: <defaults>
</compile_context>

<pallas_src>
import jax
import jax.numpy as jnp
from jax.experimental import pallas as pl
from jax.experimental.pallas import tpu as pltpu


def _pick_block_n(n_rows, n_cls, s_preds, t_preds, budget=20 * 1024 * 1024):
    """Largest batch tile whose double-buffered working set (all 2H logit
    tiles + the lane-padded label tile) stays under `budget` bytes."""
    itemsizes = [p.dtype.itemsize for p in list(s_preds) + list(t_preds)]
    sublane = max({4: 8, 2: 16, 1: 32}.get(sz, 8) for sz in itemsizes)
    per_row = 2 * (sum(itemsizes) * n_cls + 128 * 4)  # 2x = double buffering
    rows = budget // per_row
    if rows >= n_rows:
        return int(n_rows)                # whole batch fits: single tile
    rows = (rows // sublane) * sublane
    if rows < sublane:
        rows = sublane                    # huge C: minimum legal tile
    return int(min(rows, n_rows))


def _make_gkd_kernel(n_heads, temperature, block_n, n_valid_rows, needs_mask):
    inv_t = 1.0 / float(temperature)

    def kernel(label_ref, *refs):
        in_refs = refs[: 2 * n_heads]
        out_refs = refs[2 * n_heads:]

        label = label_ref[...]                                  # (bn, 1) int32

        row_valid = None
        if needs_mask:
            row = jax.lax.broadcasted_iota(jnp.int32, (block_n, 1), 0)
            first = pl.program_id(0) * block_n
            row_valid = (first + row) < n_valid_rows            # (bn, 1) bool

        for h in range(n_heads):                                # static unroll
            s_ref = in_refs[2 * h]
            t_ref = in_refs[2 * h + 1]
            kl_ref = out_refs[2 * h]
            cnt_ref = out_refs[2 * h + 1]

            s = s_ref[...].astype(jnp.float32)                  # (bn, C)
            t = t_ref[...].astype(jnp.float32)                  # (bn, C)
            if inv_t != 1.0:
                s = s * inv_t
                t = t * inv_t
            if needs_mask:
                # Zero padded rows BEFORE any reduction so stale VMEM in the
                # edge tile can never inject Inf/NaN into the sums.
                s = jnp.where(row_valid, s, 0.0)
                t = jnp.where(row_valid, t, 0.0)

            # Student log-softmax row constants (no (bn,C) log-prob tensor).
            s_max = jnp.max(s, axis=1, keepdims=True)
            s_lse = jnp.log(jnp.sum(jnp.exp(s - s_max), axis=1, keepdims=True))

            # Teacher shifted exponentials + partition function.
            t_max = jnp.max(t, axis=1, keepdims=True)
            t_exp = jnp.exp(t - t_max)
            t_z = jnp.sum(t_exp, axis=1, keepdims=True)         # (bn, 1)
            t_logz = jnp.log(t_z)
            inv_z = pl.reciprocal(t_z, approx=False)            # (bn, 1)

            # KL(teacher || student) per row:
            #   (1/Z) * sum_c e^{t_shift_c} * ((t_c - s_c) + row_const)
            row_const = (s_max + s_lse) - (t_max + t_logz)      # (bn, 1)
            kl_row = inv_z * jnp.sum(t_exp * ((t - s) + row_const),
                                     axis=1, keepdims=True)     # (bn, 1)

            # Teacher argmax on the (scaled) logits (softmax is monotone);
            # first maximal index, matching jnp/torch argmax tie behaviour.
            n_cls = t.shape[1]
            col = jax.lax.broadcasted_iota(jnp.int32, t.shape, 1)
            t_argmax = jnp.min(jnp.where(t == t_max, col, n_cls),
                               axis=1, keepdims=True)           # (bn, 1)

            hit = label == t_argmax
            if needs_mask:
                hit = jnp.logical_and(hit, row_valid)
            maskf = hit.astype(jnp.float32)                     # (bn, 1)

            # Per-(tile, head) partial sums (summed in the XLA epilogue).
            kl_ref[...] = jnp.sum(maskf * kl_row, keepdims=True)   # (1, 1)
            cnt_ref[...] = jnp.sum(maskf, keepdims=True)           # (1, 1)

    return kernel


def gkd_loss(s_preds, t_preds, label, T: float = 1.0, block_n=None):
    """Pallas implementation of GKDLoss.forward.

    s_preds / t_preds: lists of (N, C) logit arrays (any float dtype, same
    shape across heads); label: (N,) int labels.
    """
    s_preds = list(s_preds)
    t_preds = list(t_preds)
    assert len(s_preds) == len(t_preds) and len(s_preds) > 0
    shapes = {tuple(p.shape) for p in s_preds + t_preds}
    assert len(shapes) == 1, "all prediction heads must share one (N, C) shape"
    n_rows, n_cls = s_preds[0].shape
    n_heads = len(s_preds)

    label2d = jnp.asarray(label).reshape(n_rows, 1).astype(jnp.int32)

    if block_n is None:
        block_n = _pick_block_n(n_rows, n_cls, s_preds, t_preds)
    block_n = int(block_n)
    num_n = -(-n_rows // block_n)                    # ceil-div
    needs_mask = (n_rows % block_n) != 0

    kernel = _make_gkd_kernel(n_heads, float(T), block_n, n_rows, needs_mask)

    logit_spec = pl.BlockSpec((block_n, n_cls), lambda n: (n, 0))
    label_spec = pl.BlockSpec((block_n, 1), lambda n: (n, 0))
    part_spec = pl.BlockSpec((None, 1, 1), lambda n: (n, 0, 0))
    part_shape = jax.ShapeDtypeStruct((num_n, 1, 1), jnp.float32)

    in_specs = [label_spec]
    operands = [label2d]
    for s, t in zip(s_preds, t_preds):
        in_specs += [logit_spec, logit_spec]
        operands += [s, t]                            # no stacking: zero-copy

    out_specs = [part_spec] * (2 * n_heads)
    out_shapes = [part_shape] * (2 * n_heads)

    # Double-buffered working set: all 2H logit tiles + lane-padded label tile.
    per_row_bytes = 2 * (sum(p.dtype.itemsize for p in s_preds + t_preds)
                         * n_cls + 128 * 4)
    vmem_need = per_row_bytes * block_n + (4 << 20)
    vmem_limit = int(max(32 * 1024 * 1024, vmem_need))

    outs = pl.pallas_call(
        kernel,
        grid=(num_n,),
        in_specs=in_specs,
        out_specs=out_specs,
        out_shape=out_shapes,
        compiler_params=pltpu.CompilerParams(
            dimension_semantics=("parallel",),
            vmem_limit_bytes=vmem_limit),
    )(*operands)

    # Tiny XLA epilogue: loss = sum_h (sum_n kl_hn) * T^2 / (sum_n cnt_hn).
    # (count == 0 yields a non-finite head term, matching the PyTorch module.)
    t_sq = jnp.float32(float(T) * float(T))
    loss = jnp.float32(0.0)
    for h in range(n_heads):
        kl_h = jnp.sum(outs[2 * h][:, 0, 0])
        cnt_h = jnp.sum(outs[2 * h + 1][:, 0, 0])
        loss = loss + kl_h * t_sq / cnt_h
    return loss


def gkd_loss_ref(s_preds, t_preds, label, T: float = 1.0):
    """Pure-JAX reference mirroring the PyTorch module exactly."""
    loss = jnp.float32(0.0)
    for s_pred, t_pred in zip(s_preds, t_preds):
        s = jax.nn.log_softmax(s_pred / T, axis=1)
        t = jax.nn.softmax(t_pred / T, axis=1)
        t_argmax = jnp.argmax(t, axis=1)
        mask = (label == t_argmax).astype(jnp.float32)
        count = jnp.sum(mask)
        mask = mask[:, None]
        correct_s = s * mask
        correct_t = t * mask
        correct_t = jnp.where(correct_t == 0.0, 1.0, correct_t)
        kl = jnp.sum(correct_t * (jnp.log(correct_t) - correct_s))
        loss = loss + kl * (T ** 2) / count
    return loss


if __name__ == "__main__":
    # --- test 1: two heads, N=8, C=16, T=2.0 (single tile, f32) --------------
    key = jax.random.PRNGKey(0)
    k1, k2, k3, k4 = jax.random.split(key, 4)
    N, C, T = 8, 16, 2.0
    s0 = jax.random.normal(k1, (N, C), dtype=jnp.float32)
    s1 = jax.random.normal(k2, (N, C), dtype=jnp.float32)
    t0 = jax.random.normal(k3, (N, C), dtype=jnp.float32)
    t1 = t0 + 0.05 * jax.random.normal(k4, (N, C), dtype=jnp.float32)
    label = jnp.argmax(t0, axis=1).astype(jnp.int32)

    out = jax.block_until_ready(gkd_loss([s0, s1], [t0, t1], label, T=T))
    ref = jax.block_until_ready(gkd_loss_ref([s0, s1], [t0, t1], label, T=T))
    assert jnp.allclose(out, ref, rtol=1e-4, atol=1e-5), (out, ref)

    # --- test 2: three heads, N=40 (NOT divisible), forced block_n=16 --------
    # exercises the non-divisible grid + in-kernel padded-row masking path
    k5, k6, k7 = jax.random.split(jax.random.PRNGKey(1), 3)
    N2, C2, H2 = 40, 24, 3
    base_t = jax.random.normal(k5, (N2, C2), dtype=jnp.float32)
    t_preds2 = [base_t + 0.01 * jax.random.normal(jax.random.fold_in(k6, i),
                                                  (N2, C2), dtype=jnp.float32)
                for i in range(H2)]
    s_preds2 = [jax.random.normal(jax.random.fold_in(k7, i),
                                  (N2, C2), dtype=jnp.float32)
                for i in range(H2)]
    label2 = jnp.argmax(base_t, axis=1).astype(jnp.int32)

    out2 = jax.block_until_ready(
        gkd_loss(s_preds2, t_preds2, label2, T=1.0, block_n=16))
    ref2 = jax.block_until_ready(gkd_loss_ref(s_preds2, t_preds2, label2, T=1.0))
    assert jnp.allclose(out2, ref2, rtol=1e-4, atol=1e-5), (out2, ref2)

    # --- test 3: bf16 logits, two heads, N=32, C=128, T=4.0 ------------------
    k8, k9, k10, k11 = jax.random.split(jax.random.PRNGKey(2), 4)
    N3, C3, T3 = 32, 128, 4.0
    s3a = jax.random.normal(k8, (N3, C3), dtype=jnp.float32).astype(jnp.bfloat16)
    s3b = jax.random.normal(k9, (N3, C3), dtype=jnp.float32).astype(jnp.bfloat16)
    t3a = jax.random.normal(k10, (N3, C3), dtype=jnp.float32).astype(jnp.bfloat16)
    t3b = (t3a.astype(jnp.float32)
           + 0.05 * jax.random.normal(k11, (N3, C3), dtype=jnp.float32)
           ).astype(jnp.bfloat16)
    label3 = jnp.argmax(t3a.astype(jnp.float32), axis=1).astype(jnp.int32)

    out3 = jax.block_until_ready(
        gkd_loss([s3a, s3b], [t3a, t3b], label3, T=T3))
    ref3 = jax.block_until_ready(
        gkd_loss_ref([s3a.astype(jnp.float32), s3b.astype(jnp.float32)],
                     [t3a.astype(jnp.float32), t3b.astype(jnp.float32)],
                     label3, T=T3))
    assert jnp.allclose(out3, ref3, rtol=1e-4, atol=1e-4), (out3, ref3)

    print("KERNEL_OK")
</pallas_src>

<mosaic_0001>
module attributes {stable_mosaic.version = 11 : i64} {
  func.func @kernel(%arg0: i32, %arg1: memref<8x1xi32, #tpu.memory_space<vmem>>, %arg2: memref<8x16xf32, #tpu.memory_space<vmem>>, %arg3: memref<8x16xf32, #tpu.memory_space<vmem>>, %arg4: memref<8x16xf32, #tpu.memory_space<vmem>>, %arg5: memref<8x16xf32, #tpu.memory_space<vmem>>, %arg6: memref<1x1x1xf32, #tpu.memory_space<vmem>>, %arg7: memref<1x1x1xf32, #tpu.memory_space<vmem>>, %arg8: memref<1x1x1xf32, #tpu.memory_space<vmem>>, %arg9: memref<1x1x1xf32, #tpu.memory_space<vmem>>) attributes {dimension_semantics = [#tpu.dimension_semantics<parallel>], iteration_bounds = array<i64: 1>, scalar_prefetch = 0 : i64, scratch_operands = 0 : i64, tpu.core_type = #tpu.core_type<tc>, window_params = [{transform_indices = @transform_0, window_bounds = array<i64: 8, 1>}, {transform_indices = @transform_1, window_bounds = array<i64: 8, 16>}, {transform_indices = @transform_2, window_bounds = array<i64: 8, 16>}, {transform_indices = @transform_3, window_bounds = array<i64: 8, 16>}, {transform_indices = @transform_4, window_bounds = array<i64: 8, 16>}, {transform_indices = @transform_5, window_bounds = array<i64: 1, 1, 1>}, {transform_indices = @transform_6, window_bounds = array<i64: 1, 1, 1>}, {transform_indices = @transform_7, window_bounds = array<i64: 1, 1, 1>}, {transform_indices = @transform_8, window_bounds = array<i64: 1, 1, 1>}]} {
    %c0 = arith.constant 0 : index
    %c0_0 = arith.constant 0 : index
    %0 = vector.load %arg1[%c0, %c0_0] : memref<8x1xi32, #tpu.memory_space<vmem>>, vector<8x1xi32>
    %c0_1 = arith.constant 0 : index
    %c0_2 = arith.constant 0 : index
    %1 = vector.load %arg2[%c0_1, %c0_2] : memref<8x16xf32, #tpu.memory_space<vmem>>, vector<8x16xf32>
    %c0_3 = arith.constant 0 : index
    %c0_4 = arith.constant 0 : index
    %2 = vector.load %arg3[%c0_3, %c0_4] : memref<8x16xf32, #tpu.memory_space<vmem>>, vector<8x16xf32>
    %cst = arith.constant 5.000000e-01 : f32
    %3 = vector.broadcast %cst : f32 to vector<8x16xf32>
    %4 = arith.mulf %1, %3 : vector<8x16xf32>
    %cst_5 = arith.constant 5.000000e-01 : f32
    %5 = vector.broadcast %cst_5 : f32 to vector<8x16xf32>
    %6 = arith.mulf %2, %5 : vector<8x16xf32>
    %cst_6 = arith.constant dense<0xFF800000> : vector<8xf32>
    %7 = vector.multi_reduction <maximumf>, %4, %cst_6 [1] : vector<8x16xf32> to vector<8xf32>
    %8 = vector.shape_cast %7 : vector<8xf32> to vector<8x1xf32>
    %9 = vector.broadcast %8 : vector<8x1xf32> to vector<8x16xf32>
    %10 = arith.subf %4, %9 : vector<8x16xf32>
    %11 = math.exp %10 : vector<8x16xf32>
    %cst_7 = arith.constant dense<0.000000e+00> : vector<8xf32>
    %12 = vector.multi_reduction <add>, %11, %cst_7 [1] : vector<8x16xf32> to vector<8xf32>
    %13 = vector.shape_cast %12 : vector<8xf32> to vector<8x1xf32>
    %14 = math.log %13 : vector<8x1xf32>
    %cst_8 = arith.constant dense<0xFF800000> : vector<8xf32>
    %15 = vector.multi_reduction <maximumf>, %6, %cst_8 [1] : vector<8x16xf32> to vector<8xf32>
    %16 = vector.shape_cast %15 : vector<8xf32> to vector<8x1xf32>
    %17 = vector.broadcast %16 : vector<8x1xf32> to vector<8x16xf32>
    %18 = arith.subf %6, %17 : vector<8x16xf32>
    %19 = math.exp %18 : vector<8x16xf32>
    %cst_9 = arith.constant dense<0.000000e+00> : vector<8xf32>
    %20 = vector.multi_reduction <add>, %19, %cst_9 [1] : vector<8x16xf32> to vector<8xf32>
    %21 = vector.shape_cast %20 : vector<8xf32> to vector<8x1xf32>
    %22 = math.log %21 : vector<8x1xf32>
    %23 = tpu.reciprocal %21 : vector<8x1xf32> -> vector<8x1xf32>
    %24 = arith.addf %8, %14 : vector<8x1xf32>
    %25 = arith.addf %16, %22 : vector<8x1xf32>
    %26 = arith.subf %24, %25 : vector<8x1xf32>
    %27 = arith.subf %6, %4 : vector<8x16xf32>
    %28 = vector.broadcast %26 : vector<8x1xf32> to vector<8x16xf32>
    %29 = arith.addf %27, %28 : vector<8x16xf32>
    %30 = arith.mulf %19, %29 : vector<8x16xf32>
    %cst_10 = arith.constant dense<0.000000e+00> : vector<8xf32>
    %31 = vector.multi_reduction <add>, %30, %cst_10 [1] : vector<8x16xf32> to vector<8xf32>
    %32 = vector.shape_cast %31 : vector<8xf32> to vector<8x1xf32>
    %33 = arith.mulf %23, %32 : vector<8x1xf32>
    %34 = tpu.iota {dimensions = array<i32: 1>} : vector<8x16xi32>
    %35 = vector.broadcast %16 : vector<8x1xf32> to vector<8x16xf32>
    %36 = arith.cmpf oeq, %6, %35 : vector<8x16xf32>
    %c16_i32 = arith.constant 16 : i32
    %37 = vector.broadcast %c16_i32 : i32 to vector<8x16xi32>
    %38 = arith.select %36, %34, %37 : vector<8x16xi1>, vector<8x16xi32>
    %cst_11 = arith.constant dense<2147483647> : vector<8xi32>
    %39 = vector.multi_reduction <minsi>, %38, %cst_11 [1] : vector<8x16xi32> to vector<8xi32>
    %40 = vector.shape_cast %39 : vector<8xi32> to vector<8x1xi32>
    %41 = arith.cmpi eq, %0, %40 : vector<8x1xi32>
    %42 = arith.extui %41 : vector<8x1xi1> to vector<8x1xi32>
    %43 = arith.sitofp %42 : vector<8x1xi32> to vector<8x1xf32>
    %44 = arith.mulf %43, %33 : vector<8x1xf32>
    %45 = vector.shape_cast %44 : vector<8x1xf32> to vector<1x8x1xf32>
    %cst_12 = arith.constant dense<0.000000e+00> : vector<1xf32>
    %46 = vector.multi_reduction <add>, %45, %cst_12 [1, 2] : vector<1x8x1xf32> to vector<1xf32>
    %47 = vector.shape_cast %46 : vector<1xf32> to vector<1x1x1xf32>
    %48 = vector.extract %47[0, 0, 0] : f32 from vector<1x1x1xf32>
    %49 = vector.broadcast %48 : f32 to vector<1x1xf32>
    %c0_13 = arith.constant 0 : index
    %c0_14 = arith.constant 0 : index
    %c0_15 = arith.constant 0 : index
    %50 = vector.load %arg6[%c0_13, %c0_14, %c0_15] : memref<1x1x1xf32, #tpu.memory_space<vmem>>, vector<1x1x1xf32>
    %51 = vector.shape_cast %50 : vector<1x1x1xf32> to vector<1x1xf32>
    %52 = vector.shape_cast %49 : vector<1x1xf32> to vector<1x1x1xf32>
    tpu.vector_store %arg6[%c0_13, %c0_14, %c0_15], %52 {strides = array<i32>} : memref<1x1x1xf32, #tpu.memory_space<vmem>>, vector<1x1x1xf32>,
    %53 = vector.shape_cast %43 : vector<8x1xf32> to vector<1x8x1xf32>
    %cst_16 = arith.constant dense<0.000000e+00> : vector<1xf32>
    %54 = vector.multi_reduction <add>, %53, %cst_16 [1, 2] : vector<1x8x1xf32> to vector<1xf32>
    %55 = vector.shape_cast %54 : vector<1xf32> to vector<1x1x1xf32>
    %56 = vector.extract %55[0, 0, 0] : f32 from vector<1x1x1xf32>
    %57 = vector.broadcast %56 : f32 to vector<1x1xf32>
    %c0_17 = arith.constant 0 : index
    %c0_18 = arith.constant 0 : index
    %c0_19 = arith.constant 0 : index
    %58 = vector.load %arg7[%c0_17, %c0_18, %c0_19] : memref<1x1x1xf32, #tpu.memory_space<vmem>>, vector<1x1x1xf32>
    %59 = vector.shape_cast %58 : vector<1x1x1xf32> to vector<1x1xf32>
    %60 = vector.shape_cast %57 : vector<1x1xf32> to vector<1x1x1xf32>
    tpu.vector_store %arg7[%c0_17, %c0_18, %c0_19], %60 {strides = array<i32>} : memref<1x1x1xf32, #tpu.memory_space<vmem>>, vector<1x1x1xf32>,
    %c0_20 = arith.constant 0 : index
    %c0_21 = arith.constant 0 : index
    %61 = vector.load %arg4[%c0_20, %c0_21] : memref<8x16xf32, #tpu.memory_space<vmem>>, vector<8x16xf32>
    %c0_22 = arith.constant 0 : index
    %c0_23 = arith.constant 0 : index
    %62 = vector.load %arg5[%c0_22, %c0_23] : memref<8x16xf32, #tpu.memory_space<vmem>>, vector<8x16xf32>
    %cst_24 = arith.constant 5.000000e-01 : f32
    %63 = vector.broadcast %cst_24 : f32 to vector<8x16xf32>
    %64 = arith.mulf %61, %63 : vector<8x16xf32>
    %cst_25 = arith.constant 5.000000e-01 : f32
    %65 = vector.broadcast %cst_25 : f32 to vector<8x16xf32>
    %66 = arith.mulf %62, %65 : vector<8x16xf32>
    %cst_26 = arith.constant dense<0xFF800000> : vector<8xf32>
    %67 = vector.multi_reduction <maximumf>, %64, %cst_26 [1] : vector<8x16xf32> to vector<8xf32>
    %68 = vector.shape_cast %67 : vector<8xf32> to vector<8x1xf32>
    %69 = vector.broadcast %68 : vector<8x1xf32> to vector<8x16xf32>
    %70 = arith.subf %64, %69 : vector<8x16xf32>
    %71 = math.exp %70 : vector<8x16xf32>
    %cst_27 = arith.constant dense<0.000000e+00> : vector<8xf32>
    %72 = vector.multi_reduction <add>, %71, %cst_27 [1] : vector<8x16xf32> to vector<8xf32>
    %73 = vector.shape_cast %72 : vector<8xf32> to vector<8x1xf32>
    %74 = math.log %73 : vector<8x1xf32>
    %cst_28 = arith.constant dense<0xFF800000> : vector<8xf32>
    %75 = vector.multi_reduction <maximumf>, %66, %cst_28 [1] : vector<8x16xf32> to vector<8xf32>
    %76 = vector.shape_cast %75 : vector<8xf32> to vector<8x1xf32>
    %77 = vector.broadcast %76 : vector<8x1xf32> to vector<8x16xf32>
    %78 = arith.subf %66, %77 : vector<8x16xf32>
    %79 = math.exp %78 : vector<8x16xf32>
    %cst_29 = arith.constant dense<0.000000e+00> : vector<8xf32>
    %80 = vector.multi_reduction <add>, %79, %cst_29 [1] : vector<8x16xf32> to vector<8xf32>
    %81 = vector.shape_cast %80 : vector<8xf32> to vector<8x1xf32>
    %82 = math.log %81 : vector<8x1xf32>
    %83 = tpu.reciprocal %81 : vector<8x1xf32> -> vector<8x1xf32>
    %84 = arith.addf %68, %74 : vector<8x1xf32>
    %85 = arith.addf %76, %82 : vector<8x1xf32>
    %86 = arith.subf %84, %85 : vector<8x1xf32>
    %87 = arith.subf %66, %64 : vector<8x16xf32>
    %88 = vector.broadcast %86 : vector<8x1xf32> to vector<8x16xf32>
    %89 = arith.addf %87, %88 : vector<8x16xf32>
    %90 = arith.mulf %79, %89 : vector<8x16xf32>
    %cst_30 = arith.constant dense<0.000000e+00> : vector<8xf32>
    %91 = vector.multi_reduction <add>, %90, %cst_30 [1] : vector<8x16xf32> to vector<8xf32>
    %92 = vector.shape_cast %91 : vector<8xf32> to vector<8x1xf32>
    %93 = arith.mulf %83, %92 : vector<8x1xf32>
    %94 = tpu.iota {dimensions = array<i32: 1>} : vector<8x16xi32>
    %95 = vector.broadcast %76 : vector<8x1xf32> to vector<8x16xf32>
    %96 = arith.cmpf oeq, %66, %95 : vector<8x16xf32>
    %c16_i32_31 = arith.constant 16 : i32
    %97 = vector.broadcast %c16_i32_31 : i32 to vector<8x16xi32>
    %98 = arith.select %96, %94, %97 : vector<8x16xi1>, vector<8x16xi32>
    %cst_32 = arith.constant dense<2147483647> : vector<8xi32>
    %99 = vector.multi_reduction <minsi>, %98, %cst_32 [1] : vector<8x16xi32> to vector<8xi32>
    %100 = vector.shape_cast %99 : vector<8xi32> to vector<8x1xi32>
    %101 = arith.cmpi eq, %0, %100 : vector<8x1xi32>
    %102 = arith.extui %101 : vector<8x1xi1> to vector<8x1xi32>
    %103 = arith.sitofp %102 : vector<8x1xi32> to vector<8x1xf32>
    %104 = arith.mulf %103, %93 : vector<8x1xf32>
    %105 = vector.shape_cast %104 : vector<8x1xf32> to vector<1x8x1xf32>
    %cst_33 = arith.constant dense<0.000000e+00> : vector<1xf32>
    %106 = vector.multi_reduction <add>, %105, %cst_33 [1, 2] : vector<1x8x1xf32> to vector<1xf32>
    %107 = vector.shape_cast %106 : vector<1xf32> to vector<1x1x1xf32>
    %108 = vector.extract %107[0, 0, 0] : f32 from vector<1x1x1xf32>
    %109 = vector.broadcast %108 : f32 to vector<1x1xf32>
    %c0_34 = arith.constant 0 : index
    %c0_35 = arith.constant 0 : index
    %c0_36 = arith.constant 0 : index
    %110 = vector.load %arg8[%c0_34, %c0_35, %c0_36] : memref<1x1x1xf32, #tpu.memory_space<vmem>>, vector<1x1x1xf32>
    %111 = vector.shape_cast %110 : vector<1x1x1xf32> to vector<1x1xf32>
    %112 = vector.shape_cast %109 : vector<1x1xf32> to vector<1x1x1xf32>
    tpu.vector_store %arg8[%c0_34, %c0_35, %c0_36], %112 {strides = array<i32>} : memref<1x1x1xf32, #tpu.memory_space<vmem>>, vector<1x1x1xf32>,
    %113 = vector.shape_cast %103 : vector<8x1xf32> to vector<1x8x1xf32>
    %cst_37 = arith.constant dense<0.000000e+00> : vector<1xf32>
    %114 = vector.multi_reduction <add>, %113, %cst_37 [1, 2] : vector<1x8x1xf32> to vector<1xf32>
    %115 = vector.shape_cast %114 : vector<1xf32> to vector<1x1x1xf32>
    %116 = vector.extract %115[0, 0, 0] : f32 from vector<1x1x1xf32>
    %117 = vector.broadcast %116 : f32 to vector<1x1xf32>
    %c0_38 = arith.constant 0 : index
    %c0_39 = arith.constant 0 : index
    %c0_40 = arith.constant 0 : index
    %118 = vector.load %arg9[%c0_38, %c0_39, %c0_40] : memref<1x1x1xf32, #tpu.memory_space<vmem>>, vector<1x1x1xf32>
    %119 = vector.shape_cast %118 : vector<1x1x1xf32> to vector<1x1xf32>
    %120 = vector.shape_cast %117 : vector<1x1xf32> to vector<1x1x1xf32>
    tpu.vector_store %arg9[%c0_38, %c0_39, %c0_40], %120 {strides = array<i32>} : memref<1x1x1xf32, #tpu.memory_space<vmem>>, vector<1x1x1xf32>,
    return
  }
  func.func @transform_0(%arg0: i32) -> (i32, i32) {
    %c0_i32 = arith.constant 0 : i32
    %c0_i32_0 = arith.constant 0 : i32
    return %arg0, %c0_i32 : i32, i32
  }
  func.func @transform_1(%arg0: i32) -> (i32, i32) {
    %c0_i32 = arith.constant 0 : i32
    %c0_i32_0 = arith.constant 0 : i32
    return %arg0, %c0_i32 : i32, i32
  }
  func.func @transform_2(%arg0: i32) -> (i32, i32) {
    %c0_i32 = arith.constant 0 : i32
    %c0_i32_0 = arith.constant 0 : i32
    return %arg0, %c0_i32 : i32, i32
  }
  func.func @transform_3(%arg0: i32) -> (i32, i32) {
    %c0_i32 = arith.constant 0 : i32
    %c0_i32_0 = arith.constant 0 : i32
    return %arg0, %c0_i32 : i32, i32
  }
  func.func @transform_4(%arg0: i32) -> (i32, i32) {
    %c0_i32 = arith.constant 0 : i32
    %c0_i32_0 = arith.constant 0 : i32
    return %arg0, %c0_i32 : i32, i32
  }
  func.func @transform_5(%arg0: i32) -> (i32, i32, i32) {
    %c0_i32 = arith.constant 0 : i32
    %c0_i32_0 = arith.constant 0 : i32
    %c0_i32_1 = arith.constant 0 : i32
    return %arg0, %c0_i32, %c0_i32_0 : i32, i32, i32
  }
  func.func @transform_6(%arg0: i32) -> (i32, i32, i32) {
    %c0_i32 = arith.constant 0 : i32
    %c0_i32_0 = arith.constant 0 : i32
    %c0_i32_1 = arith.constant 0 : i32
    return %arg0, %c0_i32, %c0_i32_0 : i32, i32, i32
  }
  func.func @transform_7(%arg0: i32) -> (i32, i32, i32) {
    %c0_i32 = arith.constant 0 : i32
    %c0_i32_0 = arith.constant 0 : i32
    %c0_i32_1 = arith.constant 0 : i32
    return %arg0, %c0_i32, %c0_i32_0 : i32, i32, i32
  }
  func.func @transform_8(%arg0: i32) -> (i32, i32, i32) {
    %c0_i32 = arith.constant 0 : i32
    %c0_i32_0 = arith.constant 0 : i32
    %c0_i32_1 = arith.constant 0 : i32
    return %arg0, %c0_i32, %c0_i32_0 : i32, i32, i32
  }
}

</mosaic_0001>

<llo_original>
// kernel: tpu_custom_call.1
$region0: #{tpu_custom_call.1}
  #allocation0 [shape = 'u32[]', space=smem, size = 0x4, offset = 0x4, fixed_abs, tag = 'smem constant byte address 0x4 - core index']
  #allocation1 [shape = 'u32[144,128]{1,0:T(1,128)}', space=vmem, size = 0x12000, scoped, tag = 'internal scratch']
  %s0 = inlined_call_operand.vmem [shape: s32[8,1], index: 0, kind: input, shape index: {}]
  %s1 = inlined_call_operand.vmem [shape: f32[8,16], index: 1, kind: input, shape index: {}]
  %s2 = inlined_call_operand.hbm [shape: f32[8,16], index: 2, kind: input, shape index: {}]
  %s3 = inlined_call_operand.hbm [shape: f32[8,16], index: 3, kind: input, shape index: {}]
  %s4 = inlined_call_operand.vmem [shape: f32[8,16], index: 4, kind: input, shape index: {}]
  %s5 = inlined_call_operand.hbm [shape: f32[1,1,1], index: 5, kind: output, shape index: {0}]
  %s6 = inlined_call_operand.hbm [shape: f32[1,1,1], index: 6, kind: output, shape index: {1}]
  %s7 = inlined_call_operand.hbm [shape: f32[1,1,1], index: 7, kind: output, shape index: {2}]
  %s8 = inlined_call_operand.hbm [shape: f32[1,1,1], index: 8, kind: output, shape index: {3}]
  %9 = xla_tuple %s5, %s6, %s7, %s8
  %s10 = sld [smem:[#allocation0]]
  $region62: #{tpu_custom_call.1} parent=0
    _
  %s12 = ssub.s32 1, %s10
  %s13 = scalar_select 0, %s12, %s10
  $region1: #{tpu_custom_call.1} parent=0
    #allocation2 [shape = 'u8[4096]{0}', space=vmem, size = 0x1000, scoped, tag = 'input window, operand 2, single buffered']
    #allocation3 [shape = 's32[1]{0}', space=sflag, size = 0x4, scoped, tag = 'scoped memory for tpu_custom_call.1']
    #allocation4 [shape = 's32[1]{0}', space=sflag, size = 0x4, scoped, tag = 'scoped memory for tpu_custom_call.1']
    #allocation5 [shape = 'u8[4096]{0}', space=vmem, size = 0x1000, scoped, tag = 'input window, operand 3, single buffered']
    #allocation6 [shape = 's32[1]{0}', space=sflag, size = 0x4, scoped, tag = 'scoped memory for tpu_custom_call.1']
    #allocation7 [shape = 'u8[512]{0}', space=vmem, size = 0x400, scoped, tag = 'output window, operand 0, single buffered']
    #allocation8 [shape = 'u8[512]{0}', space=vmem, size = 0x400, scoped, tag = 'output window, operand 1, single buffered']
    #allocation9 [shape = 's32[1]{0}', space=sflag, size = 0x4, scoped, tag = 'scoped memory for tpu_custom_call.1']
    #allocation10 [shape = 'u8[512]{0}', space=vmem, size = 0x400, scoped, tag = 'output window, operand 2, single buffered']
    #allocation11 [shape = 'u8[512]{0}', space=vmem, size = 0x400, scoped, tag = 'output window, operand 3, single buffered']
    #allocation12 [shape = 's32[1]{0}', space=sflag, size = 0x4, scoped, tag = 'scoped memory for tpu_custom_call.1']
    %14 = vsyncpa [#allocation3], 0
    %15 = vsyncpa [#allocation6], 0
    %16 = vsyncpa [#allocation4], 0
    %17 = vsyncpa [#allocation9], 0
    %18 = vsyncpa [#allocation12], 0
    // Predicated region
    $region2: #{tpu_custom_call.1} parent=1 // pred_check
      _
    $region3: #{tpu_custom_call.1} parent=1 // pred_check_branch
      %20 = sbr.rel (0) target = $region5
    $region4: #{tpu_custom_call.1} parent=1 // pred_region
      _
    $region5: #{tpu_custom_call.1} parent=1 // pred_fallthru
      _
    // Predicated region
    $region6: #{tpu_custom_call.1} parent=1 // pred_check
      _
    $region7: #{tpu_custom_call.1} parent=1 // pred_check_branch
      %22 = sbr.rel (0) target = $region9
    $region8: #{tpu_custom_call.1} parent=1 // pred_region
      _
    $region9: #{tpu_custom_call.1} parent=1 // pred_fallthru
      _
    // Predicated region
    $region10: #{tpu_custom_call.1} parent=1 // pred_check
      _
    $region11: #{tpu_custom_call.1} parent=1 // pred_check_branch
      %24 = sbr.rel (0) target = $region13
    $region12: #{tpu_custom_call.1} parent=1 // pred_region
      %s26 = ssub.s32 128, 128
      %27 = vsyncadd [#allocation3], %s26
      %s29 = sshll.u32 [#allocation2], 4
      %s30 = int_to_ptr.vmem [resolvable:$true] %s29
      %32 = dma.hbm_to_vmem [thread:$0]  %s2, 128, %s30, [#allocation3]
    $region13: #{tpu_custom_call.1} parent=1 // pred_fallthru
      _
    // Predicated region
    $region14: #{tpu_custom_call.1} parent=1 // pred_check
      _
    $region15: #{tpu_custom_call.1} parent=1 // pred_check_branch
      %34 = sbr.rel (0) target = $region17
    $region16: #{tpu_custom_call.1} parent=1 // pred_region
      %s36 = ssub.s32 128, 128
      %37 = vsyncadd [#allocation6], %s36
      %s39 = sshll.u32 [#allocation5], 4
      %s40 = int_to_ptr.vmem [resolvable:$true] %s39
      %42 = dma.hbm_to_vmem [thread:$0]  %s3, 128, %s40, [#allocation6]
    $region17: #{tpu_custom_call.1} parent=1 // pred_fallthru
      _
    // Predicated region
    $region18: #{tpu_custom_call.1} parent=1 // pred_check
      _
    $region19: #{tpu_custom_call.1} parent=1 // pred_check_branch
      %44 = sbr.rel (0) target = $region21
    $region20: #{tpu_custom_call.1} parent=1 // pred_region
      _
    $region21: #{tpu_custom_call.1} parent=1 // pred_fallthru
      _
    // Predicated region
    $region22: #{tpu_custom_call.1} parent=1 // pred_check
      _
    $region23: #{tpu_custom_call.1} parent=1 // pred_check_branch
      %46 = sbr.rel (0) target = $region25
    $region24: #{tpu_custom_call.1} parent=1 // pred_region
      %47 = dma.done [#allocation3], 128
    $region25: #{tpu_custom_call.1} parent=1 // pred_fallthru
      _
    // Predicated region
    $region26: #{tpu_custom_call.1} parent=1 // pred_check
      _
    $region27: #{tpu_custom_call.1} parent=1 // pred_check_branch
      %49 = sbr.rel (0) target = $region29
    $region28: #{tpu_custom_call.1} parent=1 // pred_region
      %50 = dma.done [#allocation6], 128
    $region29: #{tpu_custom_call.1} parent=1 // pred_fallthru
      _
    %v51 = vld [vmem:[%s0] sm:$0xff]
    %v52 = vld [vmem:[%s1] sm:$0xff]
    %v53 = vld [vmem:[#allocation2] sm:$0xff]
    %v54 = vmul.f32 %v52, 0.5
    %v55 = vmul.f32 %v53, 0.5
    %vm56 = vcmask 130048
    %v57 = vsel %vm56, %v54, -inf
    %58 = vmax.xlane.f32.xlu0 %v57
    %v59 = vpop.xlane.xlu0 %58
    %v60 = vsub.f32 %v54, %v59
    %v61 = vmul.f32 %v60, 1.442695
    %v62 = vpow.pop %v61
    %v63 = vsel %vm56, %v62, 0.0
    %64 = vadd.xlane.f32.xlu0 %v63
    %v65 = vpop.xlane.xlu0 %64
    %v66 = vlog2.pop %v65
    %v67 = vmul.f32 %v66, 0.6931472
    %v68 = vsel %vm56, %v55, -inf
    %69 = vmax.xlane.f32.xlu0 %v68
    %v70 = vpop.xlane.xlu0 %69
    %v71 = vsub.f32 %v55, %v70
    %v72 = vmul.f32 %v71, 1.442695
    %v73 = vpow.pop %v72
    %v74 = vsel %vm56, %v73, 0.0
    %75 = vadd.xlane.f32.xlu0 %v74
    %v76 = vpop.xlane.xlu0 %75
    %v77 = vlog2.pop %v76
    %v78 = vmul.f32 %v77, 0.6931472
    %v79 = vrcp.pop %v76
    %v80 = vadd.f32 %v59, %v67
    %v81 = vadd.f32 %v70, %v78
    %v82 = vsub.f32 %v80, %v81
    %v83 = vsub.f32 %v55, %v54
    %v84 = vadd.f32 %v83, %v82
    %v85 = vmul.f32 %v73, %v84
    %v86 = vsel %vm56, %v85, 0.0
    %87 = vadd.xlane.f32.xlu0 %v86
    %v88 = vpop.xlane.xlu0 %87
    %v89 = vmul.f32 %v79, %v88
    %v90 = vlaneseq
    %v91 = vand.u32 %v90, 127
    %vm92 = vcmp.eq.f32.partialorder %v55, %v70
    %v93 = vsel %vm92, %v91, 16
    %v94 = vsel %vm56, %v93, 2147483647
    %v95 = vand.u32 %v94, 65535
    %v96 = vshra.s32 %v94, 16
    %v97 = vcvt.s32.f32 %v95
    %v98 = vcvt.s32.f32 %v96
    %99 = vmin.xlane.f32.xlu0 %v98
    %v100 = vpop.xlane.xlu0 %99
    %vm101 = vcmp.eq.f32.partialorder %v98, %v100
    %v102 = vsel %vm101, %v97, inf
    %103 = vmin.xlane.f32.xlu0 %v102
    %v104 = vpop.xlane.xlu0 %103
    %v105 = vcvt.f32.s32 %v104
    %v106 = vcvt.f32.s32 %v100
    %v107 = vshll.u32 %v106, 16
    %v108 = vadd.s32 %v107, %v105
    %vm109 = vcmp.eq.s32.totalorder %v51, %v108
    %v110 = vsel %vm109, 1, 0
    %v111 = vcvt.s32.f32 %v110
    %v112 = vmul.f32 %v111, %v89
    %vm113 = vcmask 7168
    %v114 = vsel %vm113, %v112, 0.0
    %115 = vadd.xlane.f32.xlu0 %v114
    %v116 = vpop.xlane.xlu0 %115
    %v117 = vrot.slane %v116, 4
    %v118 = vadd.f32 %v116, %v117
    %v119 = vrot.slane %v118, 2
    %v120 = vadd.f32 %v118, %v119
    %v121 = vrot.slane %v120, 1
    %v122 = vadd.f32 %v120, %v121
    %s123 = vtos %v122
    %v124 = vstv %s123
    %vm125 = vcmask 0
    %126 = vst.msk [vmem:[#allocation7] sm:$0x1] %vm125, %v124
    %v127 = vsel %vm113, %v111, 0.0
    %128 = vadd.xlane.f32.xlu0 %v127
    %v129 = vpop.xlane.xlu0 %128
    %v130 = vrot.slane %v129, 4
    %v131 = vadd.f32 %v129, %v130
    %v132 = vrot.slane %v131, 2
    %v133 = vadd.f32 %v131, %v132
    %v134 = vrot.slane %v133, 1
    %v135 = vadd.f32 %v133, %v134
    %s136 = vtos %v135
    %v137 = vstv %s136
    %138 = vst.msk [vmem:[#allocation8] sm:$0x1] %vm125, %v137
    %v139 = vld [vmem:[#allocation5] sm:$0xff]
    %v140 = vld [vmem:[%s4] sm:$0xff]
    %v141 = vmul.f32 %v139, 0.5
    %v142 = vmul.f32 %v140, 0.5
    %v143 = vsel %vm56, %v141, -inf
    %144 = vmax.xlane.f32.xlu0 %v143
    %v145 = vpop.xlane.xlu0 %144
    %v146 = vsub.f32 %v141, %v145
    %v147 = vmul.f32 %v146, 1.442695
    %v148 = vpow.pop %v147
    %v149 = vsel %vm56, %v148, 0.0
    %150 = vadd.xlane.f32.xlu0 %v149
    %v151 = vpop.xlane.xlu0 %150
    %v152 = vlog2.pop %v151
    %v153 = vmul.f32 %v152, 0.6931472
    %v154 = vsel %vm56, %v142, -inf
    %155 = vmax.xlane.f32.xlu0 %v154
    %v156 = vpop.xlane.xlu0 %155
    %v157 = vsub.f32 %v142, %v156
    %v158 = vmul.f32 %v157, 1.442695
    %v159 = vpow.pop %v158
    %v160 = vsel %vm56, %v159, 0.0
    %161 = vadd.xlane.f32.xlu0 %v160
    %v162 = vpop.xlane.xlu0 %161
    %v163 = vlog2.pop %v162
    %v164 = vmul.f32 %v163, 0.6931472
    %v165 = vrcp.pop %v162
    %v166 = vadd.f32 %v145, %v153
    %v167 = vadd.f32 %v156, %v164
    %v168 = vsub.f32 %v166, %v167
    %v169 = vsub.f32 %v142, %v141
    %v170 = vadd.f32 %v169, %v168
    %v171 = vmul.f32 %v159, %v170
    %v172 = vsel %vm56, %v171, 0.0
    %173 = vadd.xlane.f32.xlu0 %v172
    %v174 = vpop.xlane.xlu0 %173
    %v175 = vmul.f32 %v165, %v174
    %vm176 = vcmp.eq.f32.partialorder %v142, %v156
    %v177 = vsel %vm176, %v91, 16
    %v178 = vsel %vm56, %v177, 2147483647
    %v179 = vand.u32 %v178, 65535
    %v180 = vshra.s32 %v178, 16
    %v181 = vcvt.s32.f32 %v179
    %v182 = vcvt.s32.f32 %v180
    %183 = vmin.xlane.f32.xlu0 %v182
    %v184 = vpop.xlane.xlu0 %183
    %vm185 = vcmp.eq.f32.partialorder %v182, %v184
    %v186 = vsel %vm185, %v181, inf
    %187 = vmin.xlane.f32.xlu0 %v186
    %v188 = vpop.xlane.xlu0 %187
    %v189 = vcvt.f32.s32 %v188
    %v190 = vcvt.f32.s32 %v184
    %v191 = vshll.u32 %v190, 16
    %v192 = vadd.s32 %v191, %v189
    %vm193 = vcmp.eq.s32.totalorder %v51, %v192
    %v194 = vsel %vm193, 1, 0
    %v195 = vcvt.s32.f32 %v194
    %v196 = vmul.f32 %v195, %v175
    %v197 = vsel %vm113, %v196, 0.0
    %198 = vadd.xlane.f32.xlu0 %v197
    %v199 = vpop.xlane.xlu0 %198
    %v200 = vrot.slane %v199, 4
    %v201 = vadd.f32 %v199, %v200
    %v202 = vrot.slane %v201, 2
    %v203 = vadd.f32 %v201, %v202
    %v204 = vrot.slane %v203, 1
    %v205 = vadd.f32 %v203, %v204
    %s206 = vtos %v205
    %v207 = vstv %s206
    %208 = vst.msk [vmem:[#allocation10] sm:$0x1] %vm125, %v207
    %v209 = vsel %vm113, %v195, 0.0
    %210 = vadd.xlane.f32.xlu0 %v209
    %v211 = vpop.xlane.xlu0 %210
    %v212 = vrot.slane %v211, 4
    %v213 = vadd.f32 %v211, %v212
    %v214 = vrot.slane %v213, 2
    %v215 = vadd.f32 %v213, %v214
    %v216 = vrot.slane %v215, 1
    %v217 = vadd.f32 %v215, %v216
    %s218 = vtos %v217
    %v219 = vstv %s218
    %220 = vst.msk [vmem:[#allocation11] sm:$0x1] %vm125, %v219
    // Predicated region
    $region30: #{tpu_custom_call.1} parent=1 // pred_check
      _
    $region31: #{tpu_custom_call.1} parent=1 // pred_check_branch
      %222 = sbr.rel (0) target = $region33
    $region32: #{tpu_custom_call.1} parent=1 // pred_region
      %s224 = ssub.s32 16, 16
      %225 = vsyncadd [#allocation4], %s224
      %s227 = sshll.u32 [#allocation7], 4
      %s228 = int_to_ptr.vmem [resolvable:$true] %s227
      %230 = dma.vmem_to_hbm [thread:$0]  %s228, 16, %s5, [#allocation4]
    $region33: #{tpu_custom_call.1} parent=1 // pred_fallthru
      _
    // Predicated region
    $region34: #{tpu_custom_call.1} parent=1 // pred_check
      _
    $region35: #{tpu_custom_call.1} parent=1 // pred_check_branch
      %232 = sbr.rel (0) target = $region37
    $region36: #{tpu_custom_call.1} parent=1 // pred_region
      %s234 = ssub.s32 16, 16
      %235 = vsyncadd [#allocation9], %s234
      %s237 = sshll.u32 [#allocation8], 4
      %s238 = int_to_ptr.vmem [resolvable:$true] %s237
      %240 = dma.vmem_to_hbm [thread:$0]  %s238, 16, %s6, [#allocation9]
    $region37: #{tpu_custom_call.1} parent=1 // pred_fallthru
      _
    // Predicated region
    $region38: #{tpu_custom_call.1} parent=1 // pred_check
      _
    $region39: #{tpu_custom_call.1} parent=1 // pred_check_branch
      %242 = sbr.rel (0) target = $region41
    $region40: #{tpu_custom_call.1} parent=1 // pred_region
      %s244 = ssub.s32 16, 16
      %245 = vsyncadd [#allocation9], %s244
      %s247 = sshll.u32 [#allocation10], 4
      %s248 = int_to_ptr.vmem [resolvable:$true] %s247
      %250 = dma.vmem_to_hbm [thread:$0]  %s248, 16, %s7, [#allocation9]
    $region41: #{tpu_custom_call.1} parent=1 // pred_fallthru
      _
    // Predicated region
    $region42: #{tpu_custom_call.1} parent=1 // pred_check
      _
    $region43: #{tpu_custom_call.1} parent=1 // pred_check_branch
      %252 = sbr.rel (0) target = $region45
    $region44: #{tpu_custom_call.1} parent=1 // pred_region
      %s254 = ssub.s32 16, 16
      %255 = vsyncadd [#allocation12], %s254
      %s257 = sshll.u32 [#allocation11], 4
      %s258 = int_to_ptr.vmem [resolvable:$true] %s257
      %260 = dma.vmem_to_hbm [thread:$0]  %s258, 16, %s8, [#allocation12]
    $region45: #{tpu_custom_call.1} parent=1 // pred_fallthru
      _
    // Predicated region
    $region46: #{tpu_custom_call.1} parent=1 // pred_check
      _
    $region47: #{tpu_custom_call.1} parent=1 // pred_check_branch
      %262 = sbr.rel (0) target = $region49
    $region48: #{tpu_custom_call.1} parent=1 // pred_region
      %263 = dma.done [#allocation4], 16
    $region49: #{tpu_custom_call.1} parent=1 // pred_fallthru
      _
    // Predicated region
    $region50: #{tpu_custom_call.1} parent=1 // pred_check
      _
    $region51: #{tpu_custom_call.1} parent=1 // pred_check_branch
      %265 = sbr.rel (0) target = $region53
    $region52: #{tpu_custom_call.1} parent=1 // pred_region
      %266 = dma.done [#allocation9], 16
    $region53: #{tpu_custom_call.1} parent=1 // pred_fallthru
      _
    // Predicated region
    $region54: #{tpu_custom_call.1} parent=1 // pred_check
      _
    $region55: #{tpu_custom_call.1} parent=1 // pred_check_branch
      %268 = sbr.rel (0) target = $region57
    $region56: #{tpu_custom_call.1} parent=1 // pred_region
      %269 = dma.done [#allocation9], 16
    $region57: #{tpu_custom_call.1} parent=1 // pred_fallthru
      _
    // Predicated region
    $region58: #{tpu_custom_call.1} parent=1 // pred_check
      _
    $region59: #{tpu_custom_call.1} parent=1 // pred_check_branch
      %271 = sbr.rel (0) target = $region61
    $region60: #{tpu_custom_call.1} parent=1 // pred_region
      %272 = dma.done [#allocation12], 16
    $region61: #{tpu_custom_call.1} parent=1 // pred_fallthru
      _
    %273 = vsyncpa [#allocation3], 1
    %274 = vsyncpa [#allocation6], 1
    %275 = vsyncpa [#allocation4], 1
    %276 = vsyncpa [#allocation9], 1
    %277 = vsyncpa [#allocation12], 1

</llo_original>
